<compile_context>
chip_gen: v7x
topology: tpu7x:2x2x1
jax: 0.10.0
libtpu: 0.0.40
codegen_flags: <defaults>
</compile_context>

<pallas_src>
import functools
import jax
import jax.numpy as jnp
from jax import lax
from jax.experimental import pallas as pl
from jax.experimental.pallas import tpu as pltpu

RANK = 8
LORA_ALPHA = 8
USE_RSLORA = True
SCALING = LORA_ALPHA / (RANK ** 0.5) if USE_RSLORA else LORA_ALPHA / RANK


def _round_up(x, m):
    return (x + m - 1) // m * m


# -------------- fused LoRAEmbedding -> LoRALinear (one kernel) --------------
def _embed_linear_kernel(tok_ref, emb_ref, lin_w_ref, lin_b_ref, o_ref,
                         emb_scratch, *, tile_t):
    """Gather merged-embedding rows for this token tile, then one matmul.

    tok_ref     : SMEM  [pad_m]          scalar-prefetched token ids
    emb_ref     : VMEM  [vocab, dim]     merged (W + sc*A@B) embedding table
    lin_w_ref   : VMEM  [dim, out]       merged (W.T + sc*A@B) linear weight
    lin_b_ref   : VMEM  [1, out]
    o_ref       : VMEM  [tile_t, out]
    emb_scratch : VMEM  [tile_t, dim]
    """
    base = pl.program_id(0) * tile_t

    # In-kernel row gather from the VMEM-resident table (replaces the old
    # 2*m tiny HBM DMAs that serialized on the descriptor slot).
    if tile_t <= 32:
        # short, static trip count: unroll for LLO scheduler visibility
        for i in range(tile_t):
            t = tok_ref[base + i]
            emb_scratch[pl.ds(i, 1), :] = emb_ref[pl.ds(t, 1), :]
    else:
        def gather(i, carry):
            t = tok_ref[base + i]
            emb_scratch[pl.ds(i, 1), :] = emb_ref[pl.ds(t, 1), :]
            return carry
        lax.fori_loop(0, tile_t, gather, 0)

    # Single MXU pass: LoRA already folded into lin_w_ref.
    o_ref[...] = (jnp.dot(emb_scratch[...], lin_w_ref[...],
                          preferred_element_type=jnp.float32)
                  + lin_b_ref[...]).astype(o_ref.dtype)


def lora_embed_linear(tokens, emb_eff, lin_wT_eff, lin_b_row):
    lead = tokens.shape
    m = int(tokens.size)
    vocab, dim = emb_eff.shape
    out_f = lin_wT_eff.shape[1]

    # Clamp ids: the in-kernel VMEM gather has no bounds check.
    tok = jnp.clip(tokens.reshape(-1).astype(jnp.int32), 0, vocab - 1)

    # Row-tile the token axis: pipelines gathers vs. compute and lets v7x
    # shard row tiles across its two TensorCores.  Toy m=16 -> one tile.
    tile_t = 128 if m >= 256 else _round_up(m, 8)
    pad_m = _round_up(m, tile_t)
    if pad_m != m:
        tok = jnp.pad(tok, (0, pad_m - m))          # id 0 is valid; rows sliced off

    const = lambda g, tok_ref: (0, 0)               # weights resident in VMEM
    out = pl.pallas_call(
        functools.partial(_embed_linear_kernel, tile_t=tile_t),
        out_shape=jax.ShapeDtypeStruct((pad_m, out_f), jnp.float32),
        grid_spec=pltpu.PrefetchScalarGridSpec(
            num_scalar_prefetch=1,                  # token ids land in SMEM
            grid=(pad_m // tile_t,),
            in_specs=[
                pl.BlockSpec((vocab, dim), const),      # merged embedding table
                pl.BlockSpec((dim, out_f), const),      # merged linear weight
                pl.BlockSpec((1, out_f), const),        # bias row
            ],
            out_specs=pl.BlockSpec((tile_t, out_f), lambda g, tok_ref: (g, 0)),
            scratch_shapes=[pltpu.VMEM((tile_t, dim), jnp.float32)],
        ),
        compiler_params=pltpu.CompilerParams(
            dimension_semantics=("parallel",),
            # Toy sizes are tiny; at production dims re-budget for v7x (64 MiB)
            # and add a grid axis over out_f instead of keeping weights resident.
            vmem_limit_bytes=32 * 1024 * 1024),
    )(tok, emb_eff, lin_wT_eff, lin_b_row)
    return out[:m].reshape(*lead, out_f)


# ------------------------------ LoRAConv2D ----------------------------------
def _lora_conv_kernel(act_ref, w_ref, b_ref, o_ref):
    """Lane-dense conv-as-matmul: o[out_c, tile_m] = W_eff @ patches + b."""
    o_ref[...] = (jnp.dot(w_ref[...], act_ref[...],
                          preferred_element_type=jnp.float32)
                  + b_ref[...]).astype(o_ref.dtype)


def lora_conv2d(patches_km, w_eff_row, bias_col, tile_m=256):
    # patches_km: [K, M] feature-major im2col slab; w_eff_row: [out_c, K]
    K, M = patches_km.shape
    out_c = w_eff_row.shape[0]
    pad_M = _round_up(M, tile_m)
    if pad_M != M:
        patches_km = jnp.pad(patches_km, ((0, 0), (0, pad_M - M)))
    const = lambda i: (0, 0)
    out = pl.pallas_call(
        _lora_conv_kernel,
        out_shape=jax.ShapeDtypeStruct((out_c, pad_M), jnp.float32),
        grid=(pad_M // tile_m,),
        in_specs=[
            pl.BlockSpec((K, tile_m), lambda i: (0, i)),   # activation tiles
            pl.BlockSpec((out_c, K), const),               # merged weights resident
            pl.BlockSpec((out_c, 1), const),               # bias column
        ],
        # last dim tile_m is a multiple of 128 -> unmasked, lane-dense stores
        out_specs=pl.BlockSpec((out_c, tile_m), lambda i: (0, i)),
        compiler_params=pltpu.CompilerParams(
            dimension_semantics=("parallel",),             # 2 TCs on v7x
            vmem_limit_bytes=32 * 1024 * 1024),
    )(patches_km, w_eff_row, bias_col)
    return out[:, :M]


def _im2col_kchw(x_nchw, kh, kw, stride, padding):
    # One NCHW->NHWC transpose + pad + kh*kw strided slices; feature order is
    # (kh, kw, C), matching the weight flattening done at model init.  Returned
    # feature-major [K, M] so the kernel writes a lane-dense [out_c, M] output.
    B, C, H, W = x_nchw.shape
    Ho = (H + 2 * padding - kh) // stride + 1
    Wo = (W + 2 * padding - kw) // stride + 1
    x = jnp.transpose(x_nchw, (0, 2, 3, 1))
    x = jnp.pad(x, ((0, 0), (padding, padding), (padding, padding), (0, 0)))
    taps = [x[:, i:i + stride * Ho:stride, j:j + stride * Wo:stride, :]
            for i in range(kh) for j in range(kw)]
    patches = jnp.concatenate(taps, axis=-1)               # [B, Ho, Wo, kh*kw*C]
    K = kh * kw * C
    return patches.reshape(B * Ho * Wo, K).T, Ho, Wo       # [K, M]


# ------------------------------ LoraModel -----------------------------------
class LoraModelPallas:
    """JAX/Pallas analogue of LoraModel wrapping a tiny model whose target
    modules (embed, proj, conv) were swapped for LoRA layers.  forward() just
    dispatches to the wrapped model, like the PyTorch LoraModel.

    Since weights are frozen during forward, the LoRA low-rank path is folded
    into the base weights ONCE at init (numerically identical to the unmerged
    forward); the Pallas kernels then run one matmul per layer."""

    def __init__(self, key, vocab=32, dim=32, in_ch=4, out_ch=8, ksize=3):
        ks = jax.random.split(key, 11)
        u = lambda k, shape, s=0.1: jax.random.uniform(k, shape, jnp.float32, -s, s)
        self.vocab, self.dim = vocab, dim
        self.in_ch, self.out_ch, self.ksize = in_ch, out_ch, ksize
        # frozen base weights (torch layouts kept for the reference check)
        self.emb_w = u(ks[0], (vocab, dim), 1.0)
        self.lin_w = u(ks[1], (dim, dim))               # [out, in] torch layout
        self.lin_b = u(ks[2], (dim,))
        self.conv_w = u(ks[3], (out_ch, in_ch, ksize, ksize))
        self.conv_b = u(ks[4], (out_ch,))
        # LoRA params.  lora_B is zero-init in the reference; random here so the
        # low-rank path is actually exercised (still deterministic).
        self.emb_A = u(ks[5], (vocab, RANK))
        self.emb_B = u(ks[6], (RANK, dim))
        self.lin_A = u(ks[7], (dim, RANK))
        self.lin_B = u(ks[8], (RANK, dim))
        self.conv_A = u(ks[9], (RANK, in_ch, ksize, ksize))
        self.conv_B = u(ks[10], (RANK, out_ch))

        # -------- one-time weight folding (weights frozen at forward) --------
        # LoRAEmbedding:  (W + sc*A@B)[ids] == W[ids] + (A[ids]@B)*sc
        self.emb_eff = self.emb_w + SCALING * (self.emb_A @ self.emb_B)
        # LoRALinear:     x @ (W.T + sc*A@B) + b
        self.lin_wT_eff = self.lin_w.T + SCALING * (self.lin_A @ self.lin_B)
        self.lin_b_row = self.lin_b.reshape(1, dim)
        # LoRAConv2D — the PyTorch forward applies NO scaling on the lora path,
        # so none is applied here (matches the module spec, not _merge_weights).
        k_feat = ksize * ksize * in_ch                                  # (kh,kw,C)
        w_flat = self.conv_w.transpose(0, 2, 3, 1).reshape(out_ch, k_feat)
        a_flat = self.conv_A.transpose(0, 2, 3, 1).reshape(RANK, k_feat)
        self.conv_w_eff = w_flat + self.conv_B.T @ a_flat               # [out_c, K]
        self.conv_b_col = self.conv_b.reshape(out_ch, 1)
        # Production note: store these as bf16 for MXU operands (f32 accumulate)
        # — kept f32 here so the toy test meets the 1e-4 tolerance.
        # TODO(synk): lora_dropout is identity at p=0.0 (the default), so it is
        # not modeled in the kernel.

    def __call__(self, tokens, image):
        h = lora_embed_linear(tokens, self.emb_eff, self.lin_wT_eff, self.lin_b_row)
        patches_km, Ho, Wo = _im2col_kchw(image, self.ksize, self.ksize,
                                          stride=1, padding=1)
        c = lora_conv2d(patches_km, self.conv_w_eff, self.conv_b_col)
        B = image.shape[0]
        # lane-dense kernel output [out_c, B*Ho*Wo] -> NCHW
        c = c.reshape(self.out_ch, B, Ho, Wo).transpose(1, 0, 2, 3)
        return h, c


def _reference(model, tokens, image):
    # pure-JAX reference matching the PyTorch forward semantics, computed from
    # the UNMERGED parameters (proves the folded kernels preserve semantics).
    emb = model.emb_w[tokens] + (model.emb_A[tokens] @ model.emb_B) * SCALING
    h = (emb @ model.lin_w.T + model.lin_b
         + emb @ (model.lin_A @ model.lin_B * SCALING))
    dn = ('NCHW', 'OIHW', 'NCHW')
    orig = lax.conv_general_dilated(image, model.conv_w, (1, 1),
                                    [(1, 1), (1, 1)], dimension_numbers=dn)
    orig = orig + model.conv_b[None, :, None, None]
    a_out = lax.conv_general_dilated(image, model.conv_A, (1, 1),
                                     [(1, 1), (1, 1)], dimension_numbers=dn)
    c = orig + jnp.einsum('brhw,ro->bohw', a_out, model.conv_B)
    return h, c


if __name__ == "__main__":
    key = jax.random.PRNGKey(0)
    k_model, k_tok, k_img = jax.random.split(key, 3)
    model = LoraModelPallas(k_model)
    tokens = jax.random.randint(k_tok, (2, 8), 0, 32)          # [B, S]
    image = jax.random.uniform(k_img, (2, 4, 16, 16), jnp.float32, -1.0, 1.0)

    h, c = model(tokens, image)
    jax.block_until_ready((h, c))

    h_ref, c_ref = _reference(model, tokens, image)
    assert h.shape == (2, 8, 32) and c.shape == (2, 8, 16, 16)
    assert jnp.allclose(h, h_ref, atol=1e-4, rtol=1e-4)
    assert jnp.allclose(c, c_ref, atol=1e-4, rtol=1e-4)
    print("KERNEL_OK")
</pallas_src>

<mosaic_0001>
module attributes {stable_mosaic.version = 11 : i64} {
  func.func @_embed_linear_kernel(%arg0: i32, %arg1: memref<16xi32, #tpu.memory_space<smem>>, %arg2: memref<32x32xf32, #tpu.memory_space<vmem>>, %arg3: memref<32x32xf32, #tpu.memory_space<vmem>>, %arg4: memref<1x32xf32, #tpu.memory_space<vmem>>, %arg5: memref<16x32xf32, #tpu.memory_space<vmem>>, %arg6: memref<16x32xf32, #tpu.memory_space<vmem>>) attributes {dimension_semantics = [#tpu.dimension_semantics<parallel>], iteration_bounds = array<i64: 1>, scalar_prefetch = 1 : i64, scratch_operands = 1 : i64, tpu.core_type = #tpu.core_type<tc>, window_params = [{pipeline_mode = #tpu.pipeline_mode<synchronous>, transform_indices = @transform_0, window_bounds = array<i64: 32, 32>}, {pipeline_mode = #tpu.pipeline_mode<synchronous>, transform_indices = @transform_1, window_bounds = array<i64: 32, 32>}, {pipeline_mode = #tpu.pipeline_mode<synchronous>, transform_indices = @transform_2, window_bounds = array<i64: 1, 32>}, {transform_indices = @transform_3, window_bounds = array<i64: 16, 32>}]} {
    %c16_i32 = arith.constant 16 : i32
    %0 = arith.muli %arg0, %c16_i32 : i32
    %c0_i32 = arith.constant 0 : i32
    %1 = arith.addi %0, %c0_i32 : i32
    %2 = arith.index_cast %1 : i32 to index
    %3 = memref.load %arg1[%2] : memref<16xi32, #tpu.memory_space<smem>>
    %4 = arith.index_cast %3 : i32 to index
    %c0 = arith.constant 0 : index
    %5 = vector.load %arg2[%4, %c0] : memref<32x32xf32, #tpu.memory_space<vmem>>, vector<1x32xf32>
    %c0_0 = arith.constant 0 : index
    %c0_1 = arith.constant 0 : index
    %6 = vector.load %arg6[%c0_0, %c0_1] : memref<16x32xf32, #tpu.memory_space<vmem>>, vector<1x32xf32>
    tpu.vector_store %arg6[%c0_0, %c0_1], %5 {strides = array<i32>} : memref<16x32xf32, #tpu.memory_space<vmem>>, vector<1x32xf32>,
    %c1_i32 = arith.constant 1 : i32
    %7 = arith.addi %0, %c1_i32 : i32
    %8 = arith.index_cast %7 : i32 to index
    %9 = memref.load %arg1[%8] : memref<16xi32, #tpu.memory_space<smem>>
    %10 = arith.index_cast %9 : i32 to index
    %c0_2 = arith.constant 0 : index
    %11 = vector.load %arg2[%10, %c0_2] : memref<32x32xf32, #tpu.memory_space<vmem>>, vector<1x32xf32>
    %c1 = arith.constant 1 : index
    %c0_3 = arith.constant 0 : index
    %12 = vector.load %arg6[%c1, %c0_3] : memref<16x32xf32, #tpu.memory_space<vmem>>, vector<1x32xf32>
    tpu.vector_store %arg6[%c1, %c0_3], %11 {strides = array<i32>} : memref<16x32xf32, #tpu.memory_space<vmem>>, vector<1x32xf32>,
    %c2_i32 = arith.constant 2 : i32
    %13 = arith.addi %0, %c2_i32 : i32
    %14 = arith.index_cast %13 : i32 to index
    %15 = memref.load %arg1[%14] : memref<16xi32, #tpu.memory_space<smem>>
    %16 = arith.index_cast %15 : i32 to index
    %c0_4 = arith.constant 0 : index
    %17 = vector.load %arg2[%16, %c0_4] : memref<32x32xf32, #tpu.memory_space<vmem>>, vector<1x32xf32>
    %c2 = arith.constant 2 : index
    %c0_5 = arith.constant 0 : index
    %18 = vector.load %arg6[%c2, %c0_5] : memref<16x32xf32, #tpu.memory_space<vmem>>, vector<1x32xf32>
    tpu.vector_store %arg6[%c2, %c0_5], %17 {strides = array<i32>} : memref<16x32xf32, #tpu.memory_space<vmem>>, vector<1x32xf32>,
    %c3_i32 = arith.constant 3 : i32
    %19 = arith.addi %0, %c3_i32 : i32
    %20 = arith.index_cast %19 : i32 to index
    %21 = memref.load %arg1[%20] : memref<16xi32, #tpu.memory_space<smem>>
    %22 = arith.index_cast %21 : i32 to index
    %c0_6 = arith.constant 0 : index
    %23 = vector.load %arg2[%22, %c0_6] : memref<32x32xf32, #tpu.memory_space<vmem>>, vector<1x32xf32>
    %c3 = arith.constant 3 : index
    %c0_7 = arith.constant 0 : index
    %24 = vector.load %arg6[%c3, %c0_7] : memref<16x32xf32, #tpu.memory_space<vmem>>, vector<1x32xf32>
    tpu.vector_store %arg6[%c3, %c0_7], %23 {strides = array<i32>} : memref<16x32xf32, #tpu.memory_space<vmem>>, vector<1x32xf32>,
    %c4_i32 = arith.constant 4 : i32
    %25 = arith.addi %0, %c4_i32 : i32
    %26 = arith.index_cast %25 : i32 to index
    %27 = memref.load %arg1[%26] : memref<16xi32, #tpu.memory_space<smem>>
    %28 = arith.index_cast %27 : i32 to index
    %c0_8 = arith.constant 0 : index
    %29 = vector.load %arg2[%28, %c0_8] : memref<32x32xf32, #tpu.memory_space<vmem>>, vector<1x32xf32>
    %c4 = arith.constant 4 : index
    %c0_9 = arith.constant 0 : index
    %30 = vector.load %arg6[%c4, %c0_9] : memref<16x32xf32, #tpu.memory_space<vmem>>, vector<1x32xf32>
    tpu.vector_store %arg6[%c4, %c0_9], %29 {strides = array<i32>} : memref<16x32xf32, #tpu.memory_space<vmem>>, vector<1x32xf32>,
    %c5_i32 = arith.constant 5 : i32
    %31 = arith.addi %0, %c5_i32 : i32
    %32 = arith.index_cast %31 : i32 to index
    %33 = memref.load %arg1[%32] : memref<16xi32, #tpu.memory_space<smem>>
    %34 = arith.index_cast %33 : i32 to index
    %c0_10 = arith.constant 0 : index
    %35 = vector.load %arg2[%34, %c0_10] : memref<32x32xf32, #tpu.memory_space<vmem>>, vector<1x32xf32>
    %c5 = arith.constant 5 : index
    %c0_11 = arith.constant 0 : index
    %36 = vector.load %arg6[%c5, %c0_11] : memref<16x32xf32, #tpu.memory_space<vmem>>, vector<1x32xf32>
    tpu.vector_store %arg6[%c5, %c0_11], %35 {strides = array<i32>} : memref<16x32xf32, #tpu.memory_space<vmem>>, vector<1x32xf32>,
    %c6_i32 = arith.constant 6 : i32
    %37 = arith.addi %0, %c6_i32 : i32
    %38 = arith.index_cast %37 : i32 to index
    %39 = memref.load %arg1[%38] : memref<16xi32, #tpu.memory_space<smem>>
    %40 = arith.index_cast %39 : i32 to index
    %c0_12 = arith.constant 0 : index
    %41 = vector.load %arg2[%40, %c0_12] : memref<32x32xf32, #tpu.memory_space<vmem>>, vector<1x32xf32>
    %c6 = arith.constant 6 : index
    %c0_13 = arith.constant 0 : index
    %42 = vector.load %arg6[%c6, %c0_13] : memref<16x32xf32, #tpu.memory_space<vmem>>, vector<1x32xf32>
    tpu.vector_store %arg6[%c6, %c0_13], %41 {strides = array<i32>} : memref<16x32xf32, #tpu.memory_space<vmem>>, vector<1x32xf32>,
    %c7_i32 = arith.constant 7 : i32
    %43 = arith.addi %0, %c7_i32 : i32
    %44 = arith.index_cast %43 : i32 to index
    %45 = memref.load %arg1[%44] : memref<16xi32, #tpu.memory_space<smem>>
    %46 = arith.index_cast %45 : i32 to index
    %c0_14 = arith.constant 0 : index
    %47 = vector.load %arg2[%46, %c0_14] : memref<32x32xf32, #tpu.memory_space<vmem>>, vector<1x32xf32>
    %c7 = arith.constant 7 : index
    %c0_15 = arith.constant 0 : index
    %48 = vector.load %arg6[%c7, %c0_15] : memref<16x32xf32, #tpu.memory_space<vmem>>, vector<1x32xf32>
    tpu.vector_store %arg6[%c7, %c0_15], %47 {strides = array<i32>} : memref<16x32xf32, #tpu.memory_space<vmem>>, vector<1x32xf32>,
    %c8_i32 = arith.constant 8 : i32
    %49 = arith.addi %0, %c8_i32 : i32
    %50 = arith.index_cast %49 : i32 to index
    %51 = memref.load %arg1[%50] : memref<16xi32, #tpu.memory_space<smem>>
    %52 = arith.index_cast %51 : i32 to index
    %c0_16 = arith.constant 0 : index
    %53 = vector.load %arg2[%52, %c0_16] : memref<32x32xf32, #tpu.memory_space<vmem>>, vector<1x32xf32>
    %c8 = arith.constant 8 : index
    %c0_17 = arith.constant 0 : index
    %54 = vector.load %arg6[%c8, %c0_17] : memref<16x32xf32, #tpu.memory_space<vmem>>, vector<1x32xf32>
    tpu.vector_store %arg6[%c8, %c0_17], %53 {strides = array<i32>} : memref<16x32xf32, #tpu.memory_space<vmem>>, vector<1x32xf32>,
    %c9_i32 = arith.constant 9 : i32
    %55 = arith.addi %0, %c9_i32 : i32
    %56 = arith.index_cast %55 : i32 to index
    %57 = memref.load %arg1[%56] : memref<16xi32, #tpu.memory_space<smem>>
    %58 = arith.index_cast %57 : i32 to index
    %c0_18 = arith.constant 0 : index
    %59 = vector.load %arg2[%58, %c0_18] : memref<32x32xf32, #tpu.memory_space<vmem>>, vector<1x32xf32>
    %c9 = arith.constant 9 : index
    %c0_19 = arith.constant 0 : index
    %60 = vector.load %arg6[%c9, %c0_19] : memref<16x32xf32, #tpu.memory_space<vmem>>, vector<1x32xf32>
    tpu.vector_store %arg6[%c9, %c0_19], %59 {strides = array<i32>} : memref<16x32xf32, #tpu.memory_space<vmem>>, vector<1x32xf32>,
    %c10_i32 = arith.constant 10 : i32
    %61 = arith.addi %0, %c10_i32 : i32
    %62 = arith.index_cast %61 : i32 to index
    %63 = memref.load %arg1[%62] : memref<16xi32, #tpu.memory_space<smem>>
    %64 = arith.index_cast %63 : i32 to index
    %c0_20 = arith.constant 0 : index
    %65 = vector.load %arg2[%64, %c0_20] : memref<32x32xf32, #tpu.memory_space<vmem>>, vector<1x32xf32>
    %c10 = arith.constant 10 : index
    %c0_21 = arith.constant 0 : index
    %66 = vector.load %arg6[%c10, %c0_21] : memref<16x32xf32, #tpu.memory_space<vmem>>, vector<1x32xf32>
    tpu.vector_store %arg6[%c10, %c0_21], %65 {strides = array<i32>} : memref<16x32xf32, #tpu.memory_space<vmem>>, vector<1x32xf32>,
    %c11_i32 = arith.constant 11 : i32
    %67 = arith.addi %0, %c11_i32 : i32
    %68 = arith.index_cast %67 : i32 to index
    %69 = memref.load %arg1[%68] : memref<16xi32, #tpu.memory_space<smem>>
    %70 = arith.index_cast %69 : i32 to index
    %c0_22 = arith.constant 0 : index
    %71 = vector.load %arg2[%70, %c0_22] : memref<32x32xf32, #tpu.memory_space<vmem>>, vector<1x32xf32>
    %c11 = arith.constant 11 : index
    %c0_23 = arith.constant 0 : index
    %72 = vector.load %arg6[%c11, %c0_23] : memref<16x32xf32, #tpu.memory_space<vmem>>, vector<1x32xf32>
    tpu.vector_store %arg6[%c11, %c0_23], %71 {strides = array<i32>} : memref<16x32xf32, #tpu.memory_space<vmem>>, vector<1x32xf32>,
    %c12_i32 = arith.constant 12 : i32
    %73 = arith.addi %0, %c12_i32 : i32
    %74 = arith.index_cast %73 : i32 to index
    %75 = memref.load %arg1[%74] : memref<16xi32, #tpu.memory_space<smem>>
    %76 = arith.index_cast %75 : i32 to index
    %c0_24 = arith.constant 0 : index
    %77 = vector.load %arg2[%76, %c0_24] : memref<32x32xf32, #tpu.memory_space<vmem>>, vector<1x32xf32>
    %c12 = arith.constant 12 : index
    %c0_25 = arith.constant 0 : index
    %78 = vector.load %arg6[%c12, %c0_25] : memref<16x32xf32, #tpu.memory_space<vmem>>, vector<1x32xf32>
    tpu.vector_store %arg6[%c12, %c0_25], %77 {strides = array<i32>} : memref<16x32xf32, #tpu.memory_space<vmem>>, vector<1x32xf32>,
    %c13_i32 = arith.constant 13 : i32
    %79 = arith.addi %0, %c13_i32 : i32
    %80 = arith.index_cast %79 : i32 to index
    %81 = memref.load %arg1[%80] : memref<16xi32, #tpu.memory_space<smem>>
    %82 = arith.index_cast %81 : i32 to index
    %c0_26 = arith.constant 0 : index
    %83 = vector.load %arg2[%82, %c0_26] : memref<32x32xf32, #tpu.memory_space<vmem>>, vector<1x32xf32>
    %c13 = arith.constant 13 : index
    %c0_27 = arith.constant 0 : index
    %84 = vector.load %arg6[%c13, %c0_27] : memref<16x32xf32, #tpu.memory_space<vmem>>, vector<1x32xf32>
    tpu.vector_store %arg6[%c13, %c0_27], %83 {strides = array<i32>} : memref<16x32xf32, #tpu.memory_space<vmem>>, vector<1x32xf32>,
    %c14_i32 = arith.constant 14 : i32
    %85 = arith.addi %0, %c14_i32 : i32
    %86 = arith.index_cast %85 : i32 to index
    %87 = memref.load %arg1[%86] : memref<16xi32, #tpu.memory_space<smem>>
    %88 = arith.index_cast %87 : i32 to index
    %c0_28 = arith.constant 0 : index
    %89 = vector.load %arg2[%88, %c0_28] : memref<32x32xf32, #tpu.memory_space<vmem>>, vector<1x32xf32>
    %c14 = arith.constant 14 : index
    %c0_29 = arith.constant 0 : index
    %90 = vector.load %arg6[%c14, %c0_29] : memref<16x32xf32, #tpu.memory_space<vmem>>, vector<1x32xf32>
    tpu.vector_store %arg6[%c14, %c0_29], %89 {strides = array<i32>} : memref<16x32xf32, #tpu.memory_space<vmem>>, vector<1x32xf32>,
    %c15_i32 = arith.constant 15 : i32
    %91 = arith.addi %0, %c15_i32 : i32
    %92 = arith.index_cast %91 : i32 to index
    %93 = memref.load %arg1[%92] : memref<16xi32, #tpu.memory_space<smem>>
    %94 = arith.index_cast %93 : i32 to index
    %c0_30 = arith.constant 0 : index
    %95 = vector.load %arg2[%94, %c0_30] : memref<32x32xf32, #tpu.memory_space<vmem>>, vector<1x32xf32>
    %c15 = arith.constant 15 : index
    %c0_31 = arith.constant 0 : index
    %96 = vector.load %arg6[%c15, %c0_31] : memref<16x32xf32, #tpu.memory_space<vmem>>, vector<1x32xf32>
    tpu.vector_store %arg6[%c15, %c0_31], %95 {strides = array<i32>} : memref<16x32xf32, #tpu.memory_space<vmem>>, vector<1x32xf32>,
    %c0_32 = arith.constant 0 : index
    %c0_33 = arith.constant 0 : index
    %97 = vector.load %arg6[%c0_32, %c0_33] : memref<16x32xf32, #tpu.memory_space<vmem>>, vector<16x32xf32>
    %c0_34 = arith.constant 0 : index
    %c0_35 = arith.constant 0 : index
    %98 = vector.load %arg3[%c0_34, %c0_35] : memref<32x32xf32, #tpu.memory_space<vmem>>, vector<32x32xf32>
    %cst = arith.constant dense<0.000000e+00> : vector<16x32xf32>
    %99 = tpu.matmul %97, %98, %cst {dimension_numbers = #tpu.dot_dimension_numbers<[1], [0], [0], [1], [0, 0, 1, 1], [], []>} : vector<16x32xf32>, vector<32x32xf32>, vector<16x32xf32> -> vector<16x32xf32>
    %c0_36 = arith.constant 0 : index
    %c0_37 = arith.constant 0 : index
    %100 = vector.load %arg4[%c0_36, %c0_37] : memref<1x32xf32, #tpu.memory_space<vmem>>, vector<1x32xf32>
    %101 = vector.broadcast %100 : vector<1x32xf32> to vector<16x32xf32>
    %102 = arith.addf %99, %101 : vector<16x32xf32>
    %c0_38 = arith.constant 0 : index
    %c0_39 = arith.constant 0 : index
    %103 = vector.load %arg5[%c0_38, %c0_39] : memref<16x32xf32, #tpu.memory_space<vmem>>, vector<16x32xf32>
    tpu.vector_store %arg5[%c0_38, %c0_39], %102 {strides = array<i32>} : memref<16x32xf32, #tpu.memory_space<vmem>>, vector<16x32xf32>,
    return
  }
  func.func @transform_0(%arg0: i32, %arg1: memref<16xi32, #tpu.memory_space<smem>>) -> (i32, i32) {
    %c0_i32 = arith.constant 0 : i32
    %c0_i32_0 = arith.constant 0 : i32
    %c0_i32_1 = arith.constant 0 : i32
    return %c0_i32, %c0_i32_0 : i32, i32
  }
  func.func @transform_1(%arg0: i32, %arg1: memref<16xi32, #tpu.memory_space<smem>>) -> (i32, i32) {
    %c0_i32 = arith.constant 0 : i32
    %c0_i32_0 = arith.constant 0 : i32
    %c0_i32_1 = arith.constant 0 : i32
    return %c0_i32, %c0_i32_0 : i32, i32
  }
  func.func @transform_2(%arg0: i32, %arg1: memref<16xi32, #tpu.memory_space<smem>>) -> (i32, i32) {
    %c0_i32 = arith.constant 0 : i32
    %c0_i32_0 = arith.constant 0 : i32
    %c0_i32_1 = arith.constant 0 : i32
    return %c0_i32, %c0_i32_0 : i32, i32
  }
  func.func @transform_3(%arg0: i32, %arg1: memref<16xi32, #tpu.memory_space<smem>>) -> (i32, i32) {
    %c0_i32 = arith.constant 0 : i32
    %c0_i32_0 = arith.constant 0 : i32
    return %arg0, %c0_i32 : i32, i32
  }
}

</mosaic_0001>

<llo_original>
// kernel: tpu_custom_call.1
$region0: #{tpu_custom_call.1}
  #allocation0 [shape = 'u32[]', space=smem, size = 0x4, offset = 0x4, fixed_abs, tag = 'smem constant byte address 0x4 - core index']
  #allocation1 [shape = 'u32[144,128]{1,0:T(1,128)}', space=vmem, size = 0x12000, scoped, tag = 'internal scratch']
  #allocation2 [shape = 'f32[16,32]{1,0:T(8,128)}', space=vmem, size = 0x2000, scoped, tag = 'scratch operand']
  #allocation3 [shape = 's32[1]{0}', space=sflag, size = 0x4, scoped, tag = 'scoped memory for tpu_custom_call.1']
  #allocation4 [shape = 'u8[512]{0}', space=smem, size = 0x200, scoped, tag = 'prefetched SMEM operand 0']
  %s0 = inlined_call_operand.hbm [shape: s32[16], index: 0, kind: input, shape index: {}]
  %s1 = inlined_call_operand.hbm [shape: f32[32,32], index: 1, kind: input, shape index: {}]
  %s2 = inlined_call_operand.hbm [shape: f32[32,32], index: 2, kind: input, shape index: {}]
  %s3 = inlined_call_operand.vmem [shape: f32[1,32], index: 3, kind: input, shape index: {}]
  %s4 = inlined_call_operand.hbm [shape: f32[16,32], index: 4, kind: output, shape index: {}]
  %s5 = sld [smem:[#allocation0]]
  $region30: #{tpu_custom_call.1} parent=0
    _
  %s7 = ssub.s32 1, %s5
  %s8 = scalar_select 0, %s7, %s5
  %10 = dma.hbm_to_smem %s0, 16, [#allocation4], [#allocation3]
  %11 = dma.done [#allocation3], 16
  %12 = sfence
  $region1: #{tpu_custom_call.1} parent=0
    #allocation5 [shape = 'u8[16384]{0}', space=vmem, size = 0x4000, scoped, tag = 'input window, operand 1, single buffered']
    #allocation6 [shape = 's32[1]{0}', space=sflag, size = 0x4, scoped, tag = 'scoped memory for tpu_custom_call.1']
    #allocation7 [shape = 's32[1]{0}', space=sflag, size = 0x4, scoped, tag = 'scoped memory for tpu_custom_call.1']
    #allocation8 [shape = 'u8[16384]{0}', space=vmem, size = 0x4000, scoped, tag = 'input window, operand 2, single buffered']
    #allocation9 [shape = 's32[1]{0}', space=sflag, size = 0x4, scoped, tag = 'scoped memory for tpu_custom_call.1']
    #allocation10 [shape = 'u8[8192]{0}', space=vmem, size = 0x2000, scoped, tag = 'output window, operand 0, single buffered']
    %13 = vsyncpa [#allocation6], 0
    %14 = vsyncpa [#allocation9], 0
    %15 = vsyncpa [#allocation7], 0
    // Predicated region
    $region2: #{tpu_custom_call.1} parent=1 // pred_check
      _
    $region3: #{tpu_custom_call.1} parent=1 // pred_check_branch
      %17 = sbr.rel (0) target = $region5
    $region4: #{tpu_custom_call.1} parent=1 // pred_region
      %s19 = ssub.s32 512, 512
      %20 = vsyncadd [#allocation6], %s19
      %s21 = sshll.u32 [#allocation5], 4
      %s22 = int_to_ptr.vmem [resolvable:$true] %s21
      %27 = dma.hbm_to_vmem [thread:$0]  %s1, 512, %s22, [#allocation6], 128, 128, 8
    $region5: #{tpu_custom_call.1} parent=1 // pred_fallthru
      _
    // Predicated region
    $region6: #{tpu_custom_call.1} parent=1 // pred_check
      _
    $region7: #{tpu_custom_call.1} parent=1 // pred_check_branch
      %29 = sbr.rel (0) target = $region9
    $region8: #{tpu_custom_call.1} parent=1 // pred_region
      %s31 = ssub.s32 512, 512
      %32 = vsyncadd [#allocation9], %s31
      %s33 = sshll.u32 [#allocation8], 4
      %s34 = int_to_ptr.vmem [resolvable:$true] %s33
      %39 = dma.hbm_to_vmem [thread:$0]  %s2, 512, %s34, [#allocation9], 128, 128, 8
    $region9: #{tpu_custom_call.1} parent=1 // pred_fallthru
      _
    // Predicated region
    $region10: #{tpu_custom_call.1} parent=1 // pred_check
      _
    $region11: #{tpu_custom_call.1} parent=1 // pred_check_branch
      %41 = sbr.rel (0) target = $region13
    $region12: #{tpu_custom_call.1} parent=1 // pred_region
      _
    $region13: #{tpu_custom_call.1} parent=1 // pred_fallthru
      _
    // Predicated region
    $region14: #{tpu_custom_call.1} parent=1 // pred_check
      _
    $region15: #{tpu_custom_call.1} parent=1 // pred_check_branch
      %43 = sbr.rel (0) target = $region17
    $region16: #{tpu_custom_call.1} parent=1 // pred_region
      %44 = dma.done [#allocation6], 512
    $region17: #{tpu_custom_call.1} parent=1 // pred_fallthru
      _
    // Predicated region
    $region18: #{tpu_custom_call.1} parent=1 // pred_check
      _
    $region19: #{tpu_custom_call.1} parent=1 // pred_check_branch
      %46 = sbr.rel (0) target = $region21
    $region20: #{tpu_custom_call.1} parent=1 // pred_region
      %47 = dma.done [#allocation9], 512
    $region21: #{tpu_custom_call.1} parent=1 // pred_fallthru
      _
    %s48 = smul.u32 0, 16
    %s49 = sld [smem:[#allocation4 + %s48]]
    %s50 = scalar_lea.vmem [#allocation5], %s49
    %v51 = vld [vmem:[%s50] sm:$0x1]
    %vm52 = vcmask 253952
    %53 = vst.msk [vmem:[#allocation2] sm:$0x1] %vm52, %v51
    %s54 = sadd.s32 %s48, 1
    %s55 = sld [smem:[#allocation4 + %s54]]
    %s56 = scalar_lea.vmem [#allocation5], %s55
    %v57 = vld [vmem:[%s56] sm:$0x1]
    %58 = vst.msk [vmem:[#allocation2 + $0x1] sm:$0x1] %vm52, %v57
    %s59 = sadd.s32 %s48, 2
    %s60 = sld [smem:[#allocation4 + %s59]]
    %s61 = scalar_lea.vmem [#allocation5], %s60
    %v62 = vld [vmem:[%s61] sm:$0x1]
    %63 = vst.msk [vmem:[#allocation2 + $0x2] sm:$0x1] %vm52, %v62
    %s64 = sadd.s32 %s48, 3
    %s65 = sld [smem:[#allocation4 + %s64]]
    %s66 = scalar_lea.vmem [#allocation5], %s65
    %v67 = vld [vmem:[%s66] sm:$0x1]
    %68 = vst.msk [vmem:[#allocation2 + $0x3] sm:$0x1] %vm52, %v67
    %s69 = sadd.s32 %s48, 4
    %s70 = sld [smem:[#allocation4 + %s69]]
    %s71 = scalar_lea.vmem [#allocation5], %s70
    %v72 = vld [vmem:[%s71] sm:$0x1]
    %73 = vst.msk [vmem:[#allocation2 + $0x4] sm:$0x1] %vm52, %v72
    %s74 = sadd.s32 %s48, 5
    %s75 = sld [smem:[#allocation4 + %s74]]
    %s76 = scalar_lea.vmem [#allocation5], %s75
    %v77 = vld [vmem:[%s76] sm:$0x1]
    %78 = vst.msk [vmem:[#allocation2 + $0x5] sm:$0x1] %vm52, %v77
    %s79 = sadd.s32 %s48, 6
    %s80 = sld [smem:[#allocation4 + %s79]]
    %s81 = scalar_lea.vmem [#allocation5], %s80
    %v82 = vld [vmem:[%s81] sm:$0x1]
    %83 = vst.msk [vmem:[#allocation2 + $0x6] sm:$0x1] %vm52, %v82
    %s84 = sadd.s32 %s48, 7
    %s85 = sld [smem:[#allocation4 + %s84]]
    %s86 = scalar_lea.vmem [#allocation5], %s85
    %v87 = vld [vmem:[%s86] sm:$0x1]
    %88 = vst.msk [vmem:[#allocation2 + $0x7] sm:$0x1] %vm52, %v87
    %s89 = sadd.s32 %s48, 8
    %s90 = sld [smem:[#allocation4 + %s89]]
    %s91 = scalar_lea.vmem [#allocation5], %s90
    %v92 = vld [vmem:[%s91] sm:$0x1]
    %93 = vst.msk [vmem:[#allocation2 + $0x8] sm:$0x1] %vm52, %v92
    %s94 = sadd.s32 %s48, 9
    %s95 = sld [smem:[#allocation4 + %s94]]
    %s96 = scalar_lea.vmem [#allocation5], %s95
    %v97 = vld [vmem:[%s96] sm:$0x1]
    %98 = vst.msk [vmem:[#allocation2 + $0x9] sm:$0x1] %vm52, %v97
    %s99 = sadd.s32 %s48, 10
    %s100 = sld [smem:[#allocation4 + %s99]]
    %s101 = scalar_lea.vmem [#allocation5], %s100
    %v102 = vld [vmem:[%s101] sm:$0x1]
    %103 = vst.msk [vmem:[#allocation2 + $0xa] sm:$0x1] %vm52, %v102
    %s104 = sadd.s32 %s48, 11
    %s105 = sld [smem:[#allocation4 + %s104]]
    %s106 = scalar_lea.vmem [#allocation5], %s105
    %v107 = vld [vmem:[%s106] sm:$0x1]
    %108 = vst.msk [vmem:[#allocation2 + $0xb] sm:$0x1] %vm52, %v107
    %s109 = sadd.s32 %s48, 12
    %s110 = sld [smem:[#allocation4 + %s109]]
    %s111 = scalar_lea.vmem [#allocation5], %s110
    %v112 = vld [vmem:[%s111] sm:$0x1]
    %113 = vst.msk [vmem:[#allocation2 + $0xc] sm:$0x1] %vm52, %v112
    %s114 = sadd.s32 %s48, 13
    %s115 = sld [smem:[#allocation4 + %s114]]
    %s116 = scalar_lea.vmem [#allocation5], %s115
    %v117 = vld [vmem:[%s116] sm:$0x1]
    %118 = vst.msk [vmem:[#allocation2 + $0xd] sm:$0x1] %vm52, %v117
    %s119 = sadd.s32 %s48, 14
    %s120 = sld [smem:[#allocation4 + %s119]]
    %s121 = scalar_lea.vmem [#allocation5], %s120
    %v122 = vld [vmem:[%s121] sm:$0x1]
    %123 = vst.msk [vmem:[#allocation2 + $0xe] sm:$0x1] %vm52, %v122
    %s124 = sadd.s32 %s48, 15
    %s125 = sld [smem:[#allocation4 + %s124]]
    %s126 = scalar_lea.vmem [#allocation5], %s125
    %v127 = vld [vmem:[%s126] sm:$0x1]
    %128 = vst.msk [vmem:[#allocation2 + $0xf] sm:$0x1] %vm52, %v127
    %v129 = vld [vmem:[#allocation2] sm:$0xff]
    %v130 = vld [vmem:[#allocation2 + $0x8] sm:$0xff]
    %v131 = vld [vmem:[#allocation8] sm:$0xff]
    %v132 = vld [vmem:[#allocation8 + $0x8] sm:$0xff]
    %v133 = vld [vmem:[#allocation8 + $0x10] sm:$0xff]
    %v134 = vld [vmem:[#allocation8 + $0x18] sm:$0xff]
    %v135 = vld [vmem:[%s3] sm:$0x1]
    %v137 = vlaneseq
    %v138 = vshrl.u32 %v137, 7
    %v139 = vsub.s32 0, %v138
    %v140 = vrot.slane %v135, %v139
    %vm142 = vcmask 261120
    %v144 = vsel %vm142, %v129, 0
    %v147 = vsel %vm142, %v130, 0
    %149 = vmatprep.subr.mxu0 0.0
    %150 = vmatpush1.msra.mxu0 %v131
    %151 = vmatprep.subr.mxu0 0.0
    %152 = vmatpush1.msra.mxu0 %v132
    %153 = vmatprep.subr.mxu0 0.0
    %154 = vmatpush1.msra.mxu0 %v133
    %155 = vmatprep.subr.mxu0 0.0
    %156 = vmatpush1.msra.mxu0 %v134
    %157 = vmatprep.subr.mxu0 0.0
    %158 = vmatpush1.msra.mxu0 0.0
    %159 = vmatprep.subr.mxu0 0.0
    %160 = vmatpush1.msra.mxu0 0.0
    %161 = vmatprep.subr.mxu0 0.0
    %162 = vmatpush1.msra.mxu0 0.0
    %163 = vmatprep.subr.mxu0 0.0
    %164 = vmatpush1.msra.mxu0 0.0
    %165 = vmatprep.subr.mxu0 0.0
    %166 = vmatpush1.msra.mxu0 0.0
    %167 = vmatprep.subr.mxu0 0.0
    %168 = vmatpush1.msra.mxu0 0.0
    %169 = vmatprep.subr.mxu0 0.0
    %170 = vmatpush1.msra.mxu0 0.0
    %171 = vmatprep.subr.mxu0 0.0
    %172 = vmatpush1.msra.mxu0 0.0
    %173 = vmatprep.subr.mxu0 0.0
    %174 = vmatpush1.msra.mxu0 0.0
    %175 = vmatprep.subr.mxu0 0.0
    %176 = vmatpush1.msra.mxu0 0.0
    %177 = vmatprep.subr.mxu0 0.0
    %178 = vmatpush1.msra.mxu0 0.0
    %179 = vmatprep.subr.mxu0 0.0
    %180 = vmatpush1.msra.mxu0 0.0
    %181 = vmatprep.subr.mxu0 0.0
    %182 = vmatpush1.msra.mxu0 0.0
    %183 = vmatprep.subr.mxu0 0.0
    %184 = vmatpush1.msra.mxu0 0.0
    %185 = vmatprep.subr.mxu0 0.0
    %186 = vmatpush1.msra.mxu0 0.0
    %187 = vmatprep.subr.mxu0 0.0
    %188 = vmatpush1.msra.mxu0 0.0
    %189 = vmatprep.subr.mxu0 0.0
    %190 = vmatpush1.msra.mxu0 0.0
    %191 = vmatprep.subr.mxu0 0.0
    %192 = vmatpush1.msra.mxu0 0.0
    %193 = vmatprep.subr.mxu0 0.0
    %194 = vmatpush1.msra.mxu0 0.0
    %195 = vmatprep.subr.mxu0 0.0
    %196 = vmatpush1.msra.mxu0 0.0
    %197 = vmatprep.subr.mxu0 0.0
    %198 = vmatpush1.msra.mxu0 0.0
    %199 = vmatprep.subr.mxu0 0.0
    %200 = vmatpush1.msra.mxu0 0.0
    %201 = vmatprep.subr.mxu0 0.0
    %202 = vmatpush1.msra.mxu0 0.0
    %203 = vmatprep.subr.mxu0 0.0
    %204 = vmatpush1.msra.mxu0 0.0
    %205 = vmatprep.subr.mxu0 0.0
    %206 = vmatpush1.msra.mxu0 0.0
    %207 = vmatprep.subr.mxu0 0.0
    %208 = vmatpush1.msra.mxu0 0.0
    %209 = vmatprep.subr.mxu0 0.0
    %210 = vmatpush1.msra.mxu0 0.0
    %211 = vmatprep.subr.mxu0 0.0
    %212 = vmatpush1.msra.mxu0 0.0
    %213 = vmatprep.mubr.f32.mxu0 0.0
    %214 = vmatmul.mubr.f32.gmra.mrb[0].mxu0 %v144
    %v215 = vpop.f32.mrb[0].mxu0
    %v216 = vadd.f32 %v140, %v215
    %v217 = vpop.f32.mrb[0].mxu0
    %218 = vmatprep.mubr.f32.mxu0 0.0
    %219 = vmatmul.mubr.f32.gmra.mrb[0].mxu0 %v147
    %v220 = vpop.f32.mrb[0].mxu0
    %v221 = vadd.f32 %v140, %v220
    %v222 = vpop.f32.mrb[0].mxu0
    %223 = vdwg.mxu0
    %224 = vst.msk [vmem:[#allocation10] sm:$0xff] %vm142, %v216
    %225 = vst.msk [vmem:[#allocation10 + $0x8] sm:$0xff] %vm142, %v221
    // Predicated region
    $region22: #{tpu_custom_call.1} parent=1 // pred_check
      _
    $region23: #{tpu_custom_call.1} parent=1 // pred_check_branch
      %227 = sbr.rel (0) target = $region25
    $region24: #{tpu_custom_call.1} parent=1 // pred_region
      %s229 = ssub.s32 256, 256
      %230 = vsyncadd [#allocation7], %s229
      %s231 = sshll.u32 [#allocation10], 4
      %s232 = int_to_ptr.vmem [resolvable:$true] %s231
      %237 = dma.vmem_to_hbm [thread:$0]  %s232, 256, %s4, [#allocation7], 128, 128, 8
    $region25: #{tpu_custom_call.1} parent=1 // pred_fallthru
      _
    // Predicated region
    $region26: #{tpu_custom_call.1} parent=1 // pred_check
      _
    $region27: #{tpu_custom_call.1} parent=1 // pred_check_branch
      %239 = sbr.rel (0) target = $region29
    $region28: #{tpu_custom_call.1} parent=1 // pred_region
      %240 = dma.done [#allocation7], 256
    $region29: #{tpu_custom_call.1} parent=1 // pred_fallthru
      _
    %241 = vsyncpa [#allocation6], 1
    %242 = vsyncpa [#allocation9], 1
    %243 = vsyncpa [#allocation7], 1

</llo_original>
